<compile_context>
chip_gen: v5e
topology: v5e:2x2
jax: 0.10.0
libtpu: 0.0.40
codegen_flags: <defaults>
</compile_context>

<pallas_src>
import functools

import numpy as np

import jax
import jax.numpy as jnp
from jax.experimental import pallas as pl
from jax.experimental.pallas import tpu as pltpu

LANE = 128


def _round_up(v, m):
    return (v + m - 1) // m * m


def _edge_conv_kernel(tbl_ref, cnt_ref,                     # scalar prefetch (SMEM)
                      hu_ref, hv_ref, row_ref,              # per-edge streams
                      b1_ref, w2_ref, b2_ref,               # resident params
                      out_ref):                             # [TN, Fop] accumulator
    n = pl.program_id(0)
    e = pl.program_id(1)

    # Init the accumulator on the first (possibly empty) edge block of this
    # node tile.
    @pl.when(e == 0)
    def _():
        out_ref[...] = jnp.zeros_like(out_ref)

    # Only cnt[n] edge blocks actually belong to node tile n; the rest of the
    # inner axis is padding (its index_map repeats the last block, so no DMA).
    @pl.when(e < cnt_ref[n])
    def _():
        # Layer 1 (concat folded into split weights, projections precomputed):
        #   h = relu(u[row] + v[col] + b1)      -- f32 elementwise on the VPU.
        h = jnp.maximum(hu_ref[...].astype(jnp.float32)
                        + hv_ref[...].astype(jnp.float32)
                        + b1_ref[...], 0.0)                       # [TE, Hp]

        # Layer 2 on the MXU (bf16 operands by default, f32 accumulate).
        y = jnp.dot(h.astype(w2_ref.dtype), w2_ref[...],
                    preferred_element_type=jnp.float32) + b2_ref[...]  # [TE, Fop]

        # Scatter-add grouped by `row` as a one-hot contraction on the MXU.
        # onehot is built directly in [TN, TE] layout -> no transpose/relayout;
        # 0/1 values are exact in bf16.  Padded edges carry row = -1.
        tn = out_ref.shape[0]
        te = y.shape[0]
        node_ids = n * tn + jax.lax.broadcasted_iota(jnp.int32, (tn, te), 0)
        onehot = (node_ids == row_ref[...]).astype(w2_ref.dtype)   # [TN, TE]
        out_ref[...] += jax.lax.dot_general(
            onehot, y.astype(w2_ref.dtype),
            dimension_numbers=(((1,), (0,)), ((), ())),
            preferred_element_type=jnp.float32)


@functools.partial(jax.jit,
                   static_argnames=("tile_e", "tile_n", "max_blocks",
                                    "mxu_dtype"))
def _edge_conv_device(x, row_s, col_s, w1, b1, w2, b2, tbl, cnt,
                      *, tile_e, tile_n, max_blocks, mxu_dtype):
    N, F = x.shape
    E = row_s.shape[0]
    H = w1.shape[1]
    Fout = w2.shape[1]

    Hp = _round_up(H, LANE)
    Fop = _round_up(Fout, LANE)
    Np = _round_up(N, tile_n)
    Ep = _round_up(E, tile_e)
    num_nt = Np // tile_n

    # Per-node projections: concat folded into split weights.
    w_a = w1[:F, :] - w1[F:, :]
    w_b = w1[F:, :]
    u = jnp.dot(x, w_a, preferred_element_type=jnp.float32)        # [N, H]
    v = jnp.dot(x, w_b, preferred_element_type=jnp.float32)        # [N, H]

    # Glue: data-dependent per-edge gather (left to XLA).
    hu = jnp.take(u, row_s, axis=0)                                # [E, H]
    hv = jnp.take(v, col_s, axis=0)                                # [E, H]

    # Pad to lane-dense tiles.  The big per-edge streams use mxu_dtype (bf16
    # halves the HBM bytes); padded edges get row = -1 so they never match.
    hu_p = jnp.zeros((Ep, Hp), mxu_dtype).at[:E, :H].set(hu.astype(mxu_dtype))
    hv_p = jnp.zeros((Ep, Hp), mxu_dtype).at[:E, :H].set(hv.astype(mxu_dtype))
    row_p = jnp.full((1, Ep), -1, jnp.int32).at[0, :E].set(row_s)
    b1_p = jnp.zeros((1, Hp), jnp.float32).at[0, :H].set(b1)
    w2_p = jnp.zeros((Hp, Fop), mxu_dtype).at[:H, :Fout].set(w2.astype(mxu_dtype))
    b2_p = jnp.zeros((1, Fop), jnp.float32).at[0, :Fout].set(b2)

    def edge_map(n, e, tbl_ref, cnt_ref):
        return (tbl_ref[n * max_blocks + e], 0)

    def row_map(n, e, tbl_ref, cnt_ref):
        return (0, tbl_ref[n * max_blocks + e])

    def const_map(n, e, tbl_ref, cnt_ref):
        return (0, 0)

    def out_map(n, e, tbl_ref, cnt_ref):
        return (n, 0)

    grid = (num_nt, max_blocks)

    e_item = jnp.dtype(mxu_dtype).itemsize
    # ~ blocks actually processed: every edge block once + one boundary/extra
    # block per node tile.
    n_valid = Ep // tile_e + num_nt
    cost = pl.CostEstimate(
        flops=n_valid * (2 * tile_e * Hp * Fop + 2 * tile_n * tile_e * Fop),
        transcendentals=0,
        bytes_accessed=(n_valid * tile_e * (2 * Hp * e_item + 4)
                        + Hp * Fop * e_item + (Hp + Fop) * 4
                        + Np * Fop * 4),
    )

    out_p = pl.pallas_call(
        _edge_conv_kernel,
        out_shape=jax.ShapeDtypeStruct((Np, Fop), jnp.float32),
        grid_spec=pltpu.PrefetchScalarGridSpec(
            num_scalar_prefetch=2,
            grid=grid,
            in_specs=[
                pl.BlockSpec((tile_e, Hp), edge_map),    # u[row]  (sorted)
                pl.BlockSpec((tile_e, Hp), edge_map),    # v[col]  (sorted)
                pl.BlockSpec((1, tile_e), row_map),      # destination row ids
                pl.BlockSpec((1, Hp), const_map),        # b1 (resident)
                pl.BlockSpec((Hp, Fop), const_map),      # w2 (resident)
                pl.BlockSpec((1, Fop), const_map),       # b2 (resident)
            ],
            out_specs=pl.BlockSpec((tile_n, Fop), out_map),
        ),
        compiler_params=pltpu.CompilerParams(
            dimension_semantics=("parallel", "arbitrary"),
            vmem_limit_bytes=32 * 1024 * 1024,
        ),
        cost_estimate=cost,
    )(tbl, cnt, hu_p, hv_p, row_p, b1_p, w2_p, b2_p)

    return out_p[:N, :Fout]


def edge_conv(x, edge_index, w1, b1, w2, b2, *,
              tile_e=1024, tile_n=128, mxu_dtype=jnp.bfloat16):
    """EdgeConv forward (aggr='add').

    x: [N, F] f32, edge_index: [2, E] int.  Host-side preprocessing (edge sort
    by destination + per-node-tile block table) makes the grid size static and
    lets each node tile visit only its own edges.
    """
    if x.ndim == 1:
        x = x[:, None]
    N, _ = x.shape
    E = edge_index.shape[1]

    # --- host-side graph preprocessing (glue, analogous to a CSR build) -----
    row_np = np.asarray(edge_index[0], dtype=np.int32)
    col_np = np.asarray(edge_index[1], dtype=np.int32)
    perm = np.argsort(row_np, kind="stable")
    row_s_np = row_np[perm]
    col_s_np = col_np[perm]

    Np = _round_up(N, tile_n)
    Ep = _round_up(E, tile_e)
    num_nt = Np // tile_n
    num_eb = Ep // tile_e

    bounds = np.arange(num_nt + 1, dtype=np.int64) * tile_n
    starts = np.searchsorted(row_s_np, bounds[:-1], side="left")
    ends = np.searchsorted(row_s_np, bounds[1:], side="left")
    blk_lo = (starts // tile_e).astype(np.int64)
    blk_hi = np.where(ends > starts, (ends - 1) // tile_e + 1, blk_lo)
    cnt_np = (blk_hi - blk_lo).astype(np.int32)
    max_blocks = int(max(1, cnt_np.max()))

    tbl_np = np.zeros((num_nt, max_blocks), dtype=np.int32)
    for nt in range(num_nt):
        c = int(cnt_np[nt])
        if c > 0:
            tbl_np[nt, :c] = blk_lo[nt] + np.arange(c)
        # Clamp the padded tail to the last valid block: repeated block index
        # => the pipeline skips the DMA; compute is skipped via pl.when.
        tbl_np[nt, c:] = blk_lo[nt] + max(c - 1, 0)
    tbl_np = np.clip(tbl_np, 0, num_eb - 1)
    # -------------------------------------------------------------------------

    return _edge_conv_device(
        x,
        jnp.asarray(row_s_np), jnp.asarray(col_s_np),
        w1, b1, w2, b2,
        jnp.asarray(tbl_np.reshape(-1)), jnp.asarray(cnt_np),
        tile_e=tile_e, tile_n=tile_n, max_blocks=max_blocks,
        mxu_dtype=mxu_dtype)


def edge_conv_reference(x, edge_index, w1, b1, w2, b2):
    """Pure-JAX reference mirroring the PyTorch forward (aggr='add')."""
    row, col = edge_index[0], edge_index[1]
    x_i = x[row]
    x_j = x[col]
    out = jnp.concatenate([x_i, x_j - x_i], axis=1)
    out = jnp.maximum(out @ w1 + b1, 0.0) @ w2 + b2
    return jnp.zeros((x.shape[0], w2.shape[1]), jnp.float32).at[row].add(out)


if __name__ == "__main__":
    key = jax.random.PRNGKey(0)
    k_x, k_row, k_col, k_w1, k_b1, k_w2, k_b2 = jax.random.split(key, 7)

    # Small but multi-tile: 2 node tiles, ~3 edge blocks, boundary block shared
    # by both node tiles, tail-edge masking exercised.
    N, F, E, H, Fout = 200, 8, 600, 32, 8

    x = jax.random.normal(k_x, (N, F), dtype=jnp.float32)
    row = jax.random.randint(k_row, (E,), 0, N, dtype=jnp.int32)
    col = jax.random.randint(k_col, (E,), 0, N, dtype=jnp.int32)
    edge_index = jnp.stack([row, col], axis=0)                    # [2, E]

    # MLP params: Linear(2F, H) -> ReLU -> Linear(H, Fout)
    w1 = jax.random.normal(k_w1, (2 * F, H), dtype=jnp.float32) * 0.1
    b1 = jax.random.normal(k_b1, (H,), dtype=jnp.float32) * 0.1
    w2 = jax.random.normal(k_w2, (H, Fout), dtype=jnp.float32) * 0.1
    b2 = jax.random.normal(k_b2, (Fout,), dtype=jnp.float32) * 0.1

    ref = edge_conv_reference(x, edge_index, w1, b1, w2, b2)

    # Exact f32 MXU path (the v5e choice), small tiles to exercise multi-tile
    # accumulation + shared boundary blocks + skipped padded steps.
    out_f32 = edge_conv(x, edge_index, w1, b1, w2, b2,
                        tile_e=256, tile_n=128, mxu_dtype=jnp.float32)
    out_f32 = jax.block_until_ready(out_f32)
    assert out_f32.shape == (N, Fout)
    assert jnp.allclose(out_f32, ref, atol=1e-3, rtol=1e-3), "f32 mismatch"

    # Default bf16-operand path (v6e/v7x): f32 accumulate, looser tolerance.
    out_bf16 = edge_conv(x, edge_index, w1, b1, w2, b2,
                         tile_e=256, tile_n=128, mxu_dtype=jnp.bfloat16)
    out_bf16 = jax.block_until_ready(out_bf16)
    assert out_bf16.shape == (N, Fout)
    assert jnp.allclose(out_bf16, ref, atol=3e-2, rtol=3e-2), "bf16 mismatch"

    print("KERNEL_OK")
</pallas_src>

<mosaic_0001>
module attributes {stable_mosaic.version = 11 : i64} {
  func.func @_edge_conv_kernel(%arg0: i32, %arg1: i32, %arg2: memref<4xi32, #tpu.memory_space<smem>>, %arg3: memref<2xi32, #tpu.memory_space<smem>>, %arg4: memref<256x128xf32, #tpu.memory_space<vmem>>, %arg5: memref<256x128xf32, #tpu.memory_space<vmem>>, %arg6: memref<1x256xi32, #tpu.memory_space<vmem>>, %arg7: memref<1x128xf32, #tpu.memory_space<vmem>>, %arg8: memref<128x128xf32, #tpu.memory_space<vmem>>, %arg9: memref<1x128xf32, #tpu.memory_space<vmem>>, %arg10: memref<128x128xf32, #tpu.memory_space<vmem>>) attributes {dimension_semantics = [#tpu.dimension_semantics<parallel>, #tpu.dimension_semantics<arbitrary>], iteration_bounds = array<i64: 2, 2>, scalar_prefetch = 2 : i64, scratch_operands = 0 : i64, tpu.core_type = #tpu.core_type<tc>, window_params = [{transform_indices = @transform_0, window_bounds = array<i64: 256, 128>}, {transform_indices = @transform_1, window_bounds = array<i64: 256, 128>}, {transform_indices = @transform_2, window_bounds = array<i64: 1, 256>}, {pipeline_mode = #tpu.pipeline_mode<synchronous>, transform_indices = @transform_3, window_bounds = array<i64: 1, 128>}, {pipeline_mode = #tpu.pipeline_mode<synchronous>, transform_indices = @transform_4, window_bounds = array<i64: 128, 128>}, {pipeline_mode = #tpu.pipeline_mode<synchronous>, transform_indices = @transform_5, window_bounds = array<i64: 1, 128>}, {transform_indices = @transform_6, window_bounds = array<i64: 128, 128>}]} {
    %c0_i32 = arith.constant 0 : i32
    %0 = arith.cmpi eq, %arg1, %c0_i32 : i32
    %1 = arith.extui %0 : i1 to i32
    %c0_i32_0 = arith.constant 0 : i32
    %2 = arith.cmpi ne, %1, %c0_i32_0 : i32
    scf.if %2 {
      %cst = arith.constant 0.000000e+00 : f32
      %8 = vector.broadcast %cst : f32 to vector<128x128xf32>
      %c0 = arith.constant 0 : index
      %c0_2 = arith.constant 0 : index
      %9 = vector.load %arg10[%c0, %c0_2] : memref<128x128xf32, #tpu.memory_space<vmem>>, vector<128x128xf32>
      tpu.vector_store %arg10[%c0, %c0_2], %8 {strides = array<i32>} : memref<128x128xf32, #tpu.memory_space<vmem>>, vector<128x128xf32>,
    } else {
    }
    %3 = arith.index_cast %arg0 : i32 to index
    %4 = memref.load %arg3[%3] : memref<2xi32, #tpu.memory_space<smem>>
    %5 = arith.cmpi slt, %arg1, %4 : i32
    %6 = arith.extui %5 : i1 to i32
    %c0_i32_1 = arith.constant 0 : i32
    %7 = arith.cmpi ne, %6, %c0_i32_1 : i32
    scf.if %7 {
      %c0 = arith.constant 0 : index
      %c0_2 = arith.constant 0 : index
      %8 = vector.load %arg4[%c0, %c0_2] : memref<256x128xf32, #tpu.memory_space<vmem>>, vector<256x128xf32>
      %c0_3 = arith.constant 0 : index
      %c0_4 = arith.constant 0 : index
      %9 = vector.load %arg5[%c0_3, %c0_4] : memref<256x128xf32, #tpu.memory_space<vmem>>, vector<256x128xf32>
      %10 = arith.addf %8, %9 : vector<256x128xf32>
      %c0_5 = arith.constant 0 : index
      %c0_6 = arith.constant 0 : index
      %11 = vector.load %arg7[%c0_5, %c0_6] : memref<1x128xf32, #tpu.memory_space<vmem>>, vector<1x128xf32>
      %12 = vector.broadcast %11 : vector<1x128xf32> to vector<256x128xf32>
      %13 = arith.addf %10, %12 : vector<256x128xf32>
      %cst = arith.constant 0.000000e+00 : f32
      %14 = vector.broadcast %cst : f32 to vector<256x128xf32>
      %15 = arith.maximumf %13, %14 : vector<256x128xf32>
      %c0_7 = arith.constant 0 : index
      %c0_8 = arith.constant 0 : index
      %16 = vector.load %arg8[%c0_7, %c0_8] : memref<128x128xf32, #tpu.memory_space<vmem>>, vector<128x128xf32>
      %cst_9 = arith.constant dense<0.000000e+00> : vector<256x128xf32>
      %17 = tpu.matmul %15, %16, %cst_9 {dimension_numbers = #tpu.dot_dimension_numbers<[1], [0], [0], [1], [0, 0, 1, 1], [], []>} : vector<256x128xf32>, vector<128x128xf32>, vector<256x128xf32> -> vector<256x128xf32>
      %c0_10 = arith.constant 0 : index
      %c0_11 = arith.constant 0 : index
      %18 = vector.load %arg9[%c0_10, %c0_11] : memref<1x128xf32, #tpu.memory_space<vmem>>, vector<1x128xf32>
      %19 = vector.broadcast %18 : vector<1x128xf32> to vector<256x128xf32>
      %20 = arith.addf %17, %19 : vector<256x128xf32>
      %c128_i32 = arith.constant 128 : i32
      %21 = arith.muli %arg0, %c128_i32 : i32
      %22 = tpu.iota {dimensions = array<i32: 0>} : vector<128x256xi32>
      %23 = vector.broadcast %21 : i32 to vector<128x256xi32>
      %24 = arith.addi %23, %22 : vector<128x256xi32>
      %c0_12 = arith.constant 0 : index
      %c0_13 = arith.constant 0 : index
      %25 = vector.load %arg6[%c0_12, %c0_13] : memref<1x256xi32, #tpu.memory_space<vmem>>, vector<1x256xi32>
      %26 = vector.broadcast %25 : vector<1x256xi32> to vector<128x256xi32>
      %27 = arith.cmpi eq, %24, %26 : vector<128x256xi32>
      %28 = arith.extui %27 : vector<128x256xi1> to vector<128x256xi32>
      %29 = arith.sitofp %28 : vector<128x256xi32> to vector<128x256xf32>
      %c0_14 = arith.constant 0 : index
      %c0_15 = arith.constant 0 : index
      %30 = vector.load %arg10[%c0_14, %c0_15] : memref<128x128xf32, #tpu.memory_space<vmem>>, vector<128x128xf32>
      %cst_16 = arith.constant dense<0.000000e+00> : vector<128x128xf32>
      %31 = tpu.matmul %29, %20, %cst_16 {dimension_numbers = #tpu.dot_dimension_numbers<[1], [0], [0], [1], [0, 0, 1, 1], [], []>} : vector<128x256xf32>, vector<256x128xf32>, vector<128x128xf32> -> vector<128x128xf32>
      %32 = arith.addf %30, %31 : vector<128x128xf32>
      %c0_17 = arith.constant 0 : index
      %c0_18 = arith.constant 0 : index
      %33 = vector.load %arg10[%c0_17, %c0_18] : memref<128x128xf32, #tpu.memory_space<vmem>>, vector<128x128xf32>
      tpu.vector_store %arg10[%c0_17, %c0_18], %32 {strides = array<i32>} : memref<128x128xf32, #tpu.memory_space<vmem>>, vector<128x128xf32>,
    } else {
    }
    return
  }
  func.func @transform_0(%arg0: i32, %arg1: i32, %arg2: memref<4xi32, #tpu.memory_space<smem>>, %arg3: memref<2xi32, #tpu.memory_space<smem>>) -> (i32, i32) {
    %c2_i32 = arith.constant 2 : i32
    %0 = arith.muli %arg0, %c2_i32 : i32
    %1 = arith.addi %0, %arg1 : i32
    %2 = arith.index_cast %1 : i32 to index
    %3 = memref.load %arg2[%2] : memref<4xi32, #tpu.memory_space<smem>>
    %c0_i32 = arith.constant 0 : i32
    %c0_i32_0 = arith.constant 0 : i32
    return %3, %c0_i32 : i32, i32
  }
  func.func @transform_1(%arg0: i32, %arg1: i32, %arg2: memref<4xi32, #tpu.memory_space<smem>>, %arg3: memref<2xi32, #tpu.memory_space<smem>>) -> (i32, i32) {
    %c2_i32 = arith.constant 2 : i32
    %0 = arith.muli %arg0, %c2_i32 : i32
    %1 = arith.addi %0, %arg1 : i32
    %2 = arith.index_cast %1 : i32 to index
    %3 = memref.load %arg2[%2] : memref<4xi32, #tpu.memory_space<smem>>
    %c0_i32 = arith.constant 0 : i32
    %c0_i32_0 = arith.constant 0 : i32
    return %3, %c0_i32 : i32, i32
  }
  func.func @transform_2(%arg0: i32, %arg1: i32, %arg2: memref<4xi32, #tpu.memory_space<smem>>, %arg3: memref<2xi32, #tpu.memory_space<smem>>) -> (i32, i32) {
    %c2_i32 = arith.constant 2 : i32
    %0 = arith.muli %arg0, %c2_i32 : i32
    %1 = arith.addi %0, %arg1 : i32
    %2 = arith.index_cast %1 : i32 to index
    %3 = memref.load %arg2[%2] : memref<4xi32, #tpu.memory_space<smem>>
    %c0_i32 = arith.constant 0 : i32
    %c0_i32_0 = arith.constant 0 : i32
    return %c0_i32, %3 : i32, i32
  }
  func.func @transform_3(%arg0: i32, %arg1: i32, %arg2: memref<4xi32, #tpu.memory_space<smem>>, %arg3: memref<2xi32, #tpu.memory_space<smem>>) -> (i32, i32) {
    %c0_i32 = arith.constant 0 : i32
    %c0_i32_0 = arith.constant 0 : i32
    %c0_i32_1 = arith.constant 0 : i32
    return %c0_i32, %c0_i32_0 : i32, i32
  }
  func.func @transform_4(%arg0: i32, %arg1: i32, %arg2: memref<4xi32, #tpu.memory_space<smem>>, %arg3: memref<2xi32, #tpu.memory_space<smem>>) -> (i32, i32) {
    %c0_i32 = arith.constant 0 : i32
    %c0_i32_0 = arith.constant 0 : i32
    %c0_i32_1 = arith.constant 0 : i32
    return %c0_i32, %c0_i32_0 : i32, i32
  }
  func.func @transform_5(%arg0: i32, %arg1: i32, %arg2: memref<4xi32, #tpu.memory_space<smem>>, %arg3: memref<2xi32, #tpu.memory_space<smem>>) -> (i32, i32) {
    %c0_i32 = arith.constant 0 : i32
    %c0_i32_0 = arith.constant 0 : i32
    %c0_i32_1 = arith.constant 0 : i32
    return %c0_i32, %c0_i32_0 : i32, i32
  }
  func.func @transform_6(%arg0: i32, %arg1: i32, %arg2: memref<4xi32, #tpu.memory_space<smem>>, %arg3: memref<2xi32, #tpu.memory_space<smem>>) -> (i32, i32) {
    %c0_i32 = arith.constant 0 : i32
    %c0_i32_0 = arith.constant 0 : i32
    return %arg0, %c0_i32 : i32, i32
  }
}

</mosaic_0001>

<llo_original>
// kernel: _edge_conv_device.1
$region0: #{_edge_conv_device.1}
  #allocation0 [shape = 'u32[]', space=smem, size = 0x4, offset = 0x4, fixed_abs, tag = 'smem constant byte address 0x4 - core index']
  #allocation1 [shape = 'u32[72,128]{1,0:T(1,128)}', space=vmem, size = 0x9000, scoped, tag = 'internal scratch']
  #allocation2 [shape = 's32[1]{0}', space=sflag, size = 0x4, scoped, tag = 'scoped memory for _edge_conv_device.1']
  #allocation3 [shape = 'u8[512]{0}', space=smem, size = 0x200, scoped, tag = 'prefetched SMEM operand 0']
  #allocation4 [shape = 'u8[512]{0}', space=smem, size = 0x200, scoped, tag = 'prefetched SMEM operand 1']
  %s0 = inlined_call_operand.vmem [shape: s32[4], index: 0, kind: input, shape index: {}]
  %s1 = inlined_call_operand.vmem [shape: s32[2], index: 1, kind: input, shape index: {}]
  %s2 = inlined_call_operand.vmem [shape: f32[768,128], index: 2, kind: input, shape index: {}]
  %s3 = inlined_call_operand.vmem [shape: f32[768,128], index: 3, kind: input, shape index: {}]
  %s4 = inlined_call_operand.vmem [shape: s32[1,768], index: 4, kind: input, shape index: {}]
  %s5 = inlined_call_operand.vmem [shape: f32[1,128], index: 5, kind: input, shape index: {}]
  %s6 = inlined_call_operand.vmem [shape: f32[128,128], index: 6, kind: input, shape index: {}]
  %s7 = inlined_call_operand.vmem [shape: f32[1,128], index: 7, kind: input, shape index: {}]
  %s8 = inlined_call_operand.vmem [shape: f32[256,128], index: 8, kind: output, shape index: {}]
  %s9 = sld [smem:[#allocation0]]
  $region65: #{_edge_conv_device.1} parent=0
    _
  %s11 = ssub.s32 1, %s9
  %s12 = scalar_select 0, %s11, %s9
  %s14 = sshll.u32 %s0, 4
  %s15 = int_to_ptr.vmem [resolvable:$true] %s14
  %17 = dma.vmem_to_smem %s15, 16, [#allocation3], [#allocation2]
  %s19 = sshll.u32 %s1, 4
  %s20 = int_to_ptr.vmem [resolvable:$true] %s19
  %22 = dma.vmem_to_smem %s20, 16, [#allocation4], [#allocation2]
  %24 = dma.done [#allocation2], 32
  %25 = sfence
  loop: start=0, step=1, limit=6
  $region2: #{_edge_conv_device.1} parent=0 // loop_pre_header
    _
  $region3: #{_edge_conv_device.1} parent=0 // loop_header
    %s27 = sphi 0, %s31
    %p28 = scmp.ge.s32.totalorder %s27, 6
    %s34 = sphi 0, %s46
    %s35 = sphi 0, %s42
    %s36 = sphi 0, %s34
    %s37 = sphi 0, %s35
    %s38 = sphi 0, %s36
    %s39 = sphi 0, %s37
    %s55 = sphi 0, %s57
    %s58 = sphi 0, %s55
    %s59 = sphi 0, %s58
    %s75 = sphi 0, %s59
    %s87 = sphi 0, %s89
    %s90 = sphi 0, %s87
    %s91 = sphi 0, %s90
    %s107 = sphi 0, %s91
    %s119 = sphi 0, %s121
    %s122 = sphi 0, %s119
    %s123 = sphi 0, %s122
    %s139 = sphi 0, %s123
    %s143 = sphi 0, %s143
    %s145 = sphi 0, %s143
    %s146 = sphi 0, %s145
    %s160 = sphi 0, %s146
    %s164 = sphi 0, %s164
    %s166 = sphi 0, %s164
    %s167 = sphi 0, %s166
    %s181 = sphi 0, %s167
    %s185 = sphi 0, %s185
    %s187 = sphi 0, %s185
    %s188 = sphi 0, %s187
    %s202 = sphi 0, %s188
    %s208 = sphi 0, %s210
    %s211 = sphi 0, %s208
    %s212 = sphi 0, %s211
    %s228 = sphi 0, %s212
  $region4: #{_edge_conv_device.1} parent=0 // loop_header_branch
    %30 = sbr.rel (%p28) target = $region8
  $region5: #{_edge_conv_device.1} parent=0 // loop_body
    %s32 = ssub.s32 %s27, 1
    %s33 = ssub.s32 %s27, 2
    %s40 = sadd.s32 1, %s35
    %p41 = scmp.ge.s32.totalorder %s40, 2
    %s42 = scalar_select %p41, 0, %s40
    %s43 = sadd.s32 1, %s34
    %s44 = scalar_select %p41, %s43, %s34
    %p45 = scmp.ge.s32.totalorder %s44, 2
    %s46 = scalar_select %p45, 0, %s44
    %s47 = smul.u32 %s34, 2
    %s48 = sadd.s32 %s47, %s35
    %s49 = sld [smem:[#allocation3 + %s48]]
    %s50 = smul.u32 %s46, 2
    %s51 = sadd.s32 %s50, %s42
    %s52 = sld [smem:[#allocation3 + %s51]]
    %s53 = ssub.s32 %s49, %s52
    %p54 = scmp.eq.s32.totalorder %s53, 0
    %s56 = sadd.s32 %s55, 1
    %s57 = scalar_select %p54, %s55, %s56
    %p60 = pneg %p54
    %p61 = scmp.eq.s32.totalorder %s27, 3
    %p62 = por %p60, %p61
    %p63 = scmp.ne.s32.totalorder %s55, %s58
    %p64 = scmp.eq.s32.totalorder %s27, 0
    %p65 = por %p63, %p64
    %p66 = scmp.ne.s32.totalorder %s55, %s58
    %p67 = scmp.eq.s32.totalorder %s32, 3
    %p68 = por %p66, %p67
    %p69 = scmp.ne.s32.totalorder %s58, %s59
    %p70 = scmp.eq.s32.totalorder %s32, 0
    %p71 = por %p69, %p70
    %p72 = scmp.ne.s32.totalorder %s58, %s59
    %p73 = scmp.eq.s32.totalorder %s33, 3
    %p74 = por %p72, %p73
    %p76 = scmp.ne.s32.totalorder %s59, %s75
    %p77 = scmp.eq.s32.totalorder %s33, 0
    %p78 = por %p76, %p77
    %s79 = smul.u32 %s34, 2
    %s80 = sadd.s32 %s79, %s35
    %s81 = sld [smem:[#allocation3 + %s80]]
    %s82 = smul.u32 %s46, 2
    %s83 = sadd.s32 %s82, %s42
    %s84 = sld [smem:[#allocation3 + %s83]]
    %s85 = ssub.s32 %s81, %s84
    %p86 = scmp.eq.s32.totalorder %s85, 0
    %s88 = sadd.s32 %s87, 1
    %s89 = scalar_select %p86, %s87, %s88
    %p92 = pneg %p86
    %p93 = scmp.eq.s32.totalorder %s27, 3
    %p94 = por %p92, %p93
    %p95 = scmp.ne.s32.totalorder %s87, %s90
    %p96 = scmp.eq.s32.totalorder %s27, 0
    %p97 = por %p95, %p96
    %p98 = scmp.ne.s32.totalorder %s87, %s90
    %p99 = scmp.eq.s32.totalorder %s32, 3
    %p100 = por %p98, %p99
    %p101 = scmp.ne.s32.totalorder %s90, %s91
    %p102 = scmp.eq.s32.totalorder %s32, 0
    %p103 = por %p101, %p102
    %p104 = scmp.ne.s32.totalorder %s90, %s91
    %p105 = scmp.eq.s32.totalorder %s33, 3
    %p106 = por %p104, %p105
    %p108 = scmp.ne.s32.totalorder %s91, %s107
    %p109 = scmp.eq.s32.totalorder %s33, 0
    %p110 = por %p108, %p109
    %s111 = smul.u32 %s34, 2
    %s112 = sadd.s32 %s111, %s35
    %s113 = sld [smem:[#allocation3 + %s112]]
    %s114 = smul.u32 %s46, 2
    %s115 = sadd.s32 %s114, %s42
    %s116 = sld [smem:[#allocation3 + %s115]]
    %s117 = ssub.s32 %s113, %s116
    %p118 = scmp.eq.s32.totalorder %s117, 0
    %s120 = sadd.s32 %s119, 1
    %s121 = scalar_select %p118, %s119, %s120
    %p124 = pneg %p118
    %p125 = scmp.eq.s32.totalorder %s27, 3
    %p126 = por %p124, %p125
    %p127 = scmp.ne.s32.totalorder %s119, %s122
    %p128 = scmp.eq.s32.totalorder %s27, 0
    %p129 = por %p127, %p128
    %p130 = scmp.ne.s32.totalorder %s119, %s122
    %p131 = scmp.eq.s32.totalorder %s32, 3
    %p132 = por %p130, %p131
    %p133 = scmp.ne.s32.totalorder %s122, %s123
    %p134 = scmp.eq.s32.totalorder %s32, 0
    %p135 = por %p133, %p134
    %p136 = scmp.ne.s32.totalorder %s122, %s123
    %p137 = scmp.eq.s32.totalorder %s33, 3
    %p138 = por %p136, %p137
    %p140 = scmp.ne.s32.totalorder %s123, %s139
    %p141 = scmp.eq.s32.totalorder %s33, 0
    %p142 = por %p140, %p141
    %s144 = sadd.s32 %s143, 1
    %p147 = scmp.eq.s32.totalorder %s27, 3
    %p148 = scmp.ne.s32.totalorder %s143, %s145
    %p149 = scmp.eq.s32.totalorder %s27, 0
    %p150 = por %p148, %p149
    %p151 = scmp.ne.s32.totalorder %s143, %s145
    %p152 = scmp.eq.s32.totalorder %s32, 3
    %p153 = por %p151, %p152
    %p154 = scmp.ne.s32.totalorder %s145, %s146
    %p155 = scmp.eq.s32.totalorder %s32, 0
    %p156 = por %p154, %p155
    %p157 = scmp.ne.s32.totalorder %s145, %s146
    %p158 = scmp.eq.s32.totalorder %s33, 3
    %p159 = por %p157, %p158
    %p161 = scmp.ne.s32.totalorder %s146, %s160
    %p162 = scmp.eq.s32.totalorder %s33, 0
    %p163 = por %p161, %p162
    %s165 = sadd.s32 %s164, 1
    %p168 = scmp.eq.s32.totalorder %s27, 3
    %p169 = scmp.ne.s32.totalorder %s164, %s166
    %p170 = scmp.eq.s32.totalorder %s27, 0
    %p171 = por %p169, %p170
    %p172 = scmp.ne.s32.totalorder %s164, %s166
    %p173 = scmp.eq.s32.totalorder %s32, 3
    %p174 = por %p172, %p173
    %p175 = scmp.ne.s32.totalorder %s166, %s167
    %p176 = scmp.eq.s32.totalorder %s32, 0
    %p177 = por %p175, %p176
    %p178 = scmp.ne.s32.totalorder %s166, %s167
    %p179 = scmp.eq.s32.totalorder %s33, 3
    %p180 = por %p178, %p179
    %p182 = scmp.ne.s32.totalorder %s167, %s181
    %p183 = scmp.eq.s32.totalorder %s33, 0
    %p184 = por %p182, %p183
    %s186 = sadd.s32 %s185, 1
    %p189 = scmp.eq.s32.totalorder %s27, 3
    %p190 = scmp.ne.s32.totalorder %s185, %s187
    %p191 = scmp.eq.s32.totalorder %s27, 0
    %p192 = por %p190, %p191
    %p193 = scmp.ne.s32.totalorder %s185, %s187
    %p194 = scmp.eq.s32.totalorder %s32, 3
    %p195 = por %p193, %p194
    %p196 = scmp.ne.s32.totalorder %s187, %s188
    %p197 = scmp.eq.s32.totalorder %s32, 0
    %p198 = por %p196, %p197
    %p199 = scmp.ne.s32.totalorder %s187, %s188
    %p200 = scmp.eq.s32.totalorder %s33, 3
    %p201 = por %p199, %p200
    %p203 = scmp.ne.s32.totalorder %s188, %s202
    %p204 = scmp.eq.s32.totalorder %s33, 0
    %p205 = por %p203, %p204
    %s206 = ssub.s32 %s34, %s46
    %p207 = scmp.eq.s32.totalorder %s206, 0
    %s209 = sadd.s32 %s208, 1
    %s210 = scalar_select %p207, %s208, %s209
    %p213 = pneg %p207
    %p214 = scmp.eq.s32.totalorder %s27, 3
    %p215 = por %p213, %p214
    %p216 = scmp.ne.s32.totalorder %s208, %s211
    %p217 = scmp.eq.s32.totalorder %s27, 0
    %p218 = por %p216, %p217
    %p219 = scmp.ne.s32.totalorder %s208, %s211
    %p220 = scmp.eq.s32.totalorder %s32, 3
    %p221 = por %p219, %p220
    %p222 = scmp.ne.s32.totalorder %s211, %s212
    %p223 = scmp.eq.s32.totalorder %s32, 0
    %p224 = por %p222, %p223
    %p225 = scmp.ne.s32.totalorder %s211, %s212
    %p226 = scmp.eq.s32.totalorder %s33, 3
    %p227 = por %p225, %p226
    %p229 = scmp.ne.s32.totalorder %s212, %s228
    %p230 = scmp.eq.s32.totalorder %s33, 0
    %p231 = por %p229, %p230
    %p232 = scmp.le.s32.totalorder 1, %s27
    %p233 = scmp.lt.s32.totalorder %s27, 5
    %p234 = pnand %p232, %p233
    %p235 = pneg %p234
    // Predicated region
    $region9: #{_edge_conv_device.1} parent=5 // pred_check
      _
    $region10: #{_edge_conv_device.1} parent=5 // pred_check_branch
      %237 = sbr.rel (%p234) target = $region12
    $region11: #{_edge_conv_device.1} parent=5 // pred_region
      %s238 = ssub.s32 %s27, 1
      // Predicated region
      $region13: #{_edge_conv_device.1} parent=11 // pred_check
        %p239 = pneg %p156
      $region14: #{_edge_conv_device.1} parent=11 // pred_check_branch
        %241 = sbr.rel (%p239) target = $region16
      $region15: #{_edge_conv_device.1} parent=11 // pred_region
        _
      $region16: #{_edge_conv_device.1} parent=11 // pred_fallthru
        _
      // Predicated region
      $region17: #{_edge_conv_device.1} parent=11 // pred_check
        %p242 = pneg %p177
      $region18: #{_edge_conv_device.1} parent=11 // pred_check_branch
        %244 = sbr.rel (%p242) target = $region20
      $region19: #{_edge_conv_device.1} parent=11 // pred_region
        _
      $region20: #{_edge_conv_device.1} parent=11 // pred_fallthru
        _
      // Predicated region
      $region21: #{_edge_conv_device.1} parent=11 // pred_check
        %p245 = pneg %p198
      $region22: #{_edge_conv_device.1} parent=11 // pred_check_branch
        %247 = sbr.rel (%p245) target = $region24
      $region23: #{_edge_conv_device.1} parent=11 // pred_region
        _
      $region24: #{_edge_conv_device.1} parent=11 // pred_fallthru
        _
    $region12: #{_edge_conv_device.1} parent=5 // pred_fallthru
      _
    %p248 = scmp.lt.s32.totalorder %s27, 4
    // Predicated region
    $region25: #{_edge_conv_device.1} parent=5 // pred_check
      %p249 = pneg %p248
    $region26: #{_edge_conv_device.1} parent=5 // pred_check_branch
      %251 = sbr.rel (%p249) target = $region28
    $region27: #{_edge_conv_device.1} parent=5 // pred_region
      // Predicated region
      $region29: #{_edge_conv_device.1} parent=27 // pred_check
        %p252 = pneg %p65
      $region30: #{_edge_conv_device.1} parent=27 // pred_check_branch
        %254 = sbr.rel (%p252) target = $region32
      $region31: #{_edge_conv_device.1} parent=27 // pred_region
        %s255 = smul.u32 %s34, 2
        %s256 = sadd.s32 %s255, %s35
        %s257 = sld [smem:[#allocation3 + %s256]]
        %s258 = smul.u32 32, %s257
        %p259 = scmp.lt.s32.totalorder %s258, 95
        %s260 = scalar_select %p259, %s258, 95
        %s261 = smul.addr %s260, 8
        %s262 = scalar_lea.vmem %s2, %s261
        %s263 = smul.u32 %s34, 2
        %s264 = sadd.s32 %s263, %s35
        %s265 = sld [smem:[#allocation3 + %s264]]
        %s266 = smul.u32 32, %s265
      $region32: #{_edge_conv_device.1} parent=27 // pred_fallthru
        _
      // Predicated region
      $region33: #{_edge_conv_device.1} parent=27 // pred_check
        %p267 = pneg %p97
      $region34: #{_edge_conv_device.1} parent=27 // pred_check_branch
        %269 = sbr.rel (%p267) target = $region36
      $region35: #{_edge_conv_device.1} parent=27 // pred_region
        %s270 = smul.u32 %s34, 2
        %s271 = sadd.s32 %s270, %s35
        %s272 = sld [smem:[#allocation3 + %s271]]
        %s273 = smul.u32 32, %s272
        %p274 = scmp.lt.s32.totalorder %s273, 95
        %s275 = scalar_select %p274, %s273, 95
        %s276 = smul.addr %s275, 8
        %s277 = scalar_lea.vmem %s3, %s276
        %s278 = smul.u32 %s34, 2
        %s279 = sadd.s32 %s278, %s35
        %s280 = sld [smem:[#allocation3 + %s279]]
        %s281 = smul.u32 32, %s280
      $region36: #{_edge_conv_device.1} parent=27 // pred_fallthru
        _
      // Predicated region
      $region37: #{_edge_conv_device.1} parent=27 // pred_check
        %p282 = pneg %p129
      $region38: #{_edge_conv_device.1} parent=27 // pred_check_branch
        %284 = sbr.rel (%p282) target = $region40
      $region39: #{_edge_conv_device.1} parent=27 // pred_region
        %s285 = smul.u32 %s34, 2
        %s286 = sadd.s32 %s285, %s35
        %s287 = sld [smem:[#allocation3 + %s286]]
        %s288 = smul.u32 2, %s287
        %p289 = scmp.lt.s32.totalorder %s288, 5
        %s290 = scalar_select %p289, %s288, 5
        %s291 = scalar_lea.vmem %s4, %s290
        %s292 = smul.u32 %s34, 2
        %s293 = sadd.s32 %s292, %s35
        %s294 = sld [smem:[#allocation3 + %s293]]
        %s295 = smul.u32 2, %s294
      $region40: #{_edge_conv_device.1} parent=27 // pred_fallthru
        _
    $region28: #{_edge_conv_device.1} parent=5 // pred_fallthru
      _
    %p296 = scmp.le.s32.totalorder 1, %s27
    %p297 = scmp.lt.s32.totalorder %s27, 5
    %p298 = pnand %p296, %p297
    %p299 = pneg %p298
    // Predicated region
    $region41: #{_edge_conv_device.1} parent=5 // pred_check
      _
    $region42: #{_edge_conv_device.1} parent=5 // pred_check_branch
      %301 = sbr.rel (%p298) target = $region44
    $region43: #{_edge_conv_device.1} parent=5 // pred_region
      %s302 = ssub.s32 %s27, 1
      %s303 = smul.u32 %s36, 2
      %s304 = sadd.s32 %s303, %s37
      %s305 = sld [smem:[#allocation3 + %s304]]
      %s306 = smul.u32 32, %s305
      %p307 = scmp.lt.s32.totalorder %s306, 95
      %s308 = scalar_select %p307, %s306, 95
      %s309 = smul.addr %s308, 8
      %s310 = scalar_lea.vmem %s2, %s309
      %p311 = pneg %p71
      %p312 = pneg %p68
      %s313 = smul.u32 %s36, 2
      %s314 = sadd.s32 %s313, %s37
      %s315 = sld [smem:[#allocation3 + %s314]]
      %s316 = smul.u32 32, %s315
      %p317 = scmp.lt.s32.totalorder %s316, 95
      %s318 = scalar_select %p317, %s316, 95
      %s319 = smul.addr %s318, 8
      %s320 = scalar_lea.vmem %s3, %s319
      %p321 = pneg %p103
      %p322 = pneg %p100
      %s323 = smul.u32 %s36, 2
      %s324 = sadd.s32 %s323, %s37
      %s325 = sld [smem:[#allocation3 + %s324]]
      %s326 = smul.u32 2, %s325
      %p327 = scmp.lt.s32.totalorder %s326, 5
      %s328 = scalar_select %p327, %s326, 5
      %s329 = scalar_lea.vmem %s4, %s328
      %p330 = pneg %p135
      %p331 = pneg %p132
      %p332 = pneg %p156
      %p333 = pneg %p153
      %p334 = pneg %p177
      %p335 = pneg %p174
      %p336 = pneg %p198
      %p337 = pneg %p195
      %p338 = pneg %p224
      %p339 = pneg %p221
      %s340 = smul.u32 16, %s36
      %p341 = scmp.lt.s32.totalorder %s340, 31
      %s342 = scalar_select %p341, %s340, 31
      %s343 = smul.addr %s342, 8
      %s344 = scalar_lea.vmem %s8, %s343
      %s345 = smul.u32 %s36, 2
      %s346 = sadd.s32 %s345, %s37
      %s347 = sld [smem:[#allocation3 + %s346]]
      %s348 = smul.u32 32, %s347
      %p349 = scmp.lt.s32.totalorder %s348, 95
      %s350 = scalar_select %p349, %s348, 95
      %s351 = smul.addr %s350, 8
      %s352 = scalar_lea.vmem %s2, %s351
      %s353 = smul.u32 %s36, 2
      %s354 = sadd.s32 %s353, %s37
      %s355 = sld [smem:[#allocation3 + %s354]]
      %s356 = smul.u32 32, %s355
      %s357 = smul.u32 %s36, 2
      %s358 = sadd.s32 %s357, %s37
      %s359 = sld [smem:[#allocation3 + %s358]]
      %s360 = smul.u32 32, %s359
      %p361 = scmp.lt.s32.totalorder %s360, 95
      %s362 = scalar_select %p361, %s360, 95
      %s363 = smul.addr %s362, 8
      %s364 = scalar_lea.vmem %s3, %s363
      %s365 = smul.u32 %s36, 2
      %s366 = sadd.s32 %s365, %s37
      %s367 = sld [smem:[#allocation3 + %s366]]
      %s368 = smul.u32 32, %s367
      %s369 = smul.u32 %s36, 2
      %s370 = sadd.s32 %s369, %s37
      %s371 = sld [smem:[#allocation3 + %s370]]
      %s372 = smul.u32 2, %s371
      %p373 = scmp.lt.s32.totalorder %s372, 5
      %s374 = scalar_select %p373, %s372, 5
      %s375 = scalar_lea.vmem %s4, %s374
      %s376 = smul.u32 %s36, 2
      %s377 = sadd.s32 %s376, %s37
      %s378 = sld [smem:[#allocation3 + %s377]]
      %s379 = smul.u32 2, %s378
      %s380 = smul.u32 16, %s36
      %p381 = scmp.lt.s32.totalorder %s380, 31
      %s382 = scalar_select %p381, %s380, 31
      %s383 = smul.addr %s382, 8
      %s384 = scalar_lea.vmem %s8, %s383
      %s385 = smul.u32 16, %s36
      %p386 = scmp.eq.s32.totalorder %s37, 0
      // Predicated region
      $region45: #{_edge_conv_device.1} parent=43 // pred_check
        %p387 = pneg %p386
      $region46: #{_edge_conv_device.1} parent=43 // pred_check_branch
        %389 = sbr.rel (%p387) target = $region48
      $region47: #{_edge_conv_device.1} parent=43 // pred_region
        %390 = vst [vmem:[%s384] sm:$0xff] 0.0
        %391 = vst [vmem:[%s384 + $0x8] sm:$0xff] 0.0
        %392 = vst [vmem:[%s384 + $0x10] sm:$0xff] 0.0
        %393 = vst [vmem:[%s384 + $0x18] sm:$0xff] 0.0
        %394 = vst [vmem:[%s384 + $0x20] sm:$0xff] 0.0
        %395 = vst [vmem:[%s384 + $0x28] sm:$0xff] 0.0
        %396 = vst [vmem:[%s384 + $0x30] sm:$0xff] 0.0
        %397 = vst [vmem:[%s384 + $0x38] sm:$0xff] 0.0
        %398 = vst [vmem:[%s384 + $0x40] sm:$0xff] 0.0
        %399 = vst [vmem:[%s384 + $0x48] sm:$0xff] 0.0
        %400 = vst [vmem:[%s384 + $0x50] sm:$0xff] 0.0
        %401 = vst [vmem:[%s384 + $0x58] sm:$0xff] 0.0
        %402 = vst [vmem:[%s384 + $0x60] sm:$0xff] 0.0
        %403 = vst [vmem:[%s384 + $0x68] sm:$0xff] 0.0
        %404 = vst [vmem:[%s384 + $0x70] sm:$0xff] 0.0
        %405 = vst [vmem:[%s384 + $0x78] sm:$0xff] 0.0
      $region48: #{_edge_conv_device.1} parent=43 // pred_fallthru
        _
      %s406 = sld [smem:[#allocation4 + %s36]]
      %p407 = scmp.lt.s32.totalorder %s37, %s406
      // Predicated region
      $region49: #{_edge_conv_device.1} parent=43 // pred_check
        %p408 = pneg %p407
      $region50: #{_edge_conv_device.1} parent=43 // pred_check_branch
        %410 = sbr.rel (%p408) target = $region52
      $region51: #{_edge_conv_device.1} parent=43 // pred_region
        %v411 = vld [vmem:[%s352] sm:$0xff]
        %v412 = vld [vmem:[%s352 + $0x8] sm:$0xff]
        %v413 = vld [vmem:[%s352 + $0x10] sm:$0xff]
        %v414 = vld [vmem:[%s352 + $0x18] sm:$0xff]
        %v415 = vld [vmem:[%s352 + $0x20] sm:$0xff]
        %v416 = vld [vmem:[%s352 + $0x28] sm:$0xff]
        %v417 = vld [vmem:[%s352 + $0x30] sm:$0xff]
        %v418 = vld [vmem:[%s352 + $0x38] sm:$0xff]
        %v419 = vld [vmem:[%s352 + $0x40] sm:$0xff]
        %v420 = vld [vmem:[%s352 + $0x48] sm:$0xff]
        %v421 = vld [vmem:[%s352 + $0x50] sm:$0xff]
        %v422 = vld [vmem:[%s352 + $0x58] sm:$0xff]
        %v423 = vld [vmem:[%s352 + $0x60] sm:$0xff]
        %v424 = vld [vmem:[%s352 + $0x68] sm:$0xff]
        %v425 = vld [vmem:[%s352 + $0x70] sm:$0xff]
        %v426 = vld [vmem:[%s352 + $0x78] sm:$0xff]
        %v427 = vld [vmem:[%s352 + $0x80] sm:$0xff]
        %v428 = vld [vmem:[%s352 + $0x88] sm:$0xff]
        %v429 = vld [vmem:[%s352 + $0x90] sm:$0xff]
        %v430 = vld [vmem:[%s352 + $0x98] sm:$0xff]
        %v431 = vld [vmem:[%s352 + $0xa0] sm:$0xff]
        %v432 = vld [vmem:[%s352 + $0xa8] sm:$0xff]
        %v433 = vld [vmem:[%s352 + $0xb0] sm:$0xff]
        %v434 = vld [vmem:[%s352 + $0xb8] sm:$0xff]
        %v435 = vld [vmem:[%s352 + $0xc0] sm:$0xff]
        %v436 = vld [vmem:[%s352 + $0xc8] sm:$0xff]
        %v437 = vld [vmem:[%s352 + $0xd0] sm:$0xff]
        %v438 = vld [vmem:[%s352 + $0xd8] sm:$0xff]
        %v439 = vld [vmem:[%s352 + $0xe0] sm:$0xff]
        %v440 = vld [vmem:[%s352 + $0xe8] sm:$0xff]
        %v441 = vld [vmem:[%s352 + $0xf0] sm:$0xff]
        %v442 = vld [vmem:[%s352 + $0xf8] sm:$0xff]
        %v443 = vld [vmem:[%s364] sm:$0xff]
        %v444 = vld [vmem:[%s364 + $0x8] sm:$0xff]
        %v445 = vld [vmem:[%s364 + $0x10] sm:$0xff]
        %v446 = vld [vmem:[%s364 + $0x18] sm:$0xff]
        %v447 = vld [vmem:[%s364 + $0x20] sm:$0xff]
        %v448 = vld [vmem:[%s364 + $0x28] sm:$0xff]
        %v449 = vld [vmem:[%s364 + $0x30] sm:$0xff]
        %v450 = vld [vmem:[%s364 + $0x38] sm:$0xff]
        %v451 = vld [vmem:[%s364 + $0x40] sm:$0xff]
        %v452 = vld [vmem:[%s364 + $0x48] sm:$0xff]
        %v453 = vld [vmem:[%s364 + $0x50] sm:$0xff]
        %v454 = vld [vmem:[%s364 + $0x58] sm:$0xff]
        %v455 = vld [vmem:[%s364 + $0x60] sm:$0xff]
        %v456 = vld [vmem:[%s364 + $0x68] sm:$0xff]
        %v457 = vld [vmem:[%s364 + $0x70] sm:$0xff]
        %v458 = vld [vmem:[%s364 + $0x78] sm:$0xff]
        %v459 = vld [vmem:[%s364 + $0x80] sm:$0xff]
        %v460 = vld [vmem:[%s364 + $0x88] sm:$0xff]
        %v461 = vld [vmem:[%s364 + $0x90] sm:$0xff]
        %v462 = vld [vmem:[%s364 + $0x98] sm:$0xff]
        %v463 = vld [vmem:[%s364 + $0xa0] sm:$0xff]
        %v464 = vld [vmem:[%s364 + $0xa8] sm:$0xff]
        %v465 = vld [vmem:[%s364 + $0xb0] sm:$0xff]
        %v466 = vld [vmem:[%s364 + $0xb8] sm:$0xff]
        %v467 = vld [vmem:[%s364 + $0xc0] sm:$0xff]
        %v468 = vld [vmem:[%s364 + $0xc8] sm:$0xff]
        %v469 = vld [vmem:[%s364 + $0xd0] sm:$0xff]
        %v470 = vld [vmem:[%s364 + $0xd8] sm:$0xff]
        %v471 = vld [vmem:[%s364 + $0xe0] sm:$0xff]
        %v472 = vld [vmem:[%s364 + $0xe8] sm:$0xff]
        %v473 = vld [vmem:[%s364 + $0xf0] sm:$0xff]
        %v474 = vld [vmem:[%s364 + $0xf8] sm:$0xff]
        %v475 = vadd.f32 %v411, %v443
        %v476 = vadd.f32 %v412, %v444
        %v477 = vadd.f32 %v413, %v445
        %v478 = vadd.f32 %v414, %v446
        %v479 = vadd.f32 %v415, %v447
        %v480 = vadd.f32 %v416, %v448
        %v481 = vadd.f32 %v417, %v449
        %v482 = vadd.f32 %v418, %v450
        %v483 = vadd.f32 %v419, %v451
        %v484 = vadd.f32 %v420, %v452
        %v485 = vadd.f32 %v421, %v453
        %v486 = vadd.f32 %v422, %v454
        %v487 = vadd.f32 %v423, %v455
        %v488 = vadd.f32 %v424, %v456
        %v489 = vadd.f32 %v425, %v457
        %v490 = vadd.f32 %v426, %v458
        %v491 = vadd.f32 %v427, %v459
        %v492 = vadd.f32 %v428, %v460
        %v493 = vadd.f32 %v429, %v461
        %v494 = vadd.f32 %v430, %v462
        %v495 = vadd.f32 %v431, %v463
        %v496 = vadd.f32 %v432, %v464
        %v497 = vadd.f32 %v433, %v465
        %v498 = vadd.f32 %v434, %v466
        %v499 = vadd.f32 %v435, %v467
        %v500 = vadd.f32 %v436, %v468
        %v501 = vadd.f32 %v437, %v469
        %v502 = vadd.f32 %v438, %v470
        %v503 = vadd.f32 %v439, %v471
        %v504 = vadd.f32 %v440, %v472
        %v505 = vadd.f32 %v441, %v473
        %v506 = vadd.f32 %v442, %v474
        %v507 = vld [vmem:[%s5] sm:$0x1]
        %v509 = vperm.slane %v507, 0
        %v511 = vadd.f32 %v475, %v509
        %v512 = vadd.f32 %v476, %v509
        %v513 = vadd.f32 %v477, %v509
        %v514 = vadd.f32 %v478, %v509
        %v515 = vadd.f32 %v479, %v509
        %v516 = vadd.f32 %v480, %v509
        %v517 = vadd.f32 %v481, %v509
        %v518 = vadd.f32 %v482, %v509
        %v519 = vadd.f32 %v483, %v509
        %v520 = vadd.f32 %v484, %v509
        %v521 = vadd.f32 %v485, %v509
        %v522 = vadd.f32 %v486, %v509
        %v523 = vadd.f32 %v487, %v509
        %v524 = vadd.f32 %v488, %v509
        %v525 = vadd.f32 %v489, %v509
        %v526 = vadd.f32 %v490, %v509
        %v527 = vadd.f32 %v491, %v509
        %v528 = vadd.f32 %v492, %v509
        %v529 = vadd.f32 %v493, %v509
        %v530 = vadd.f32 %v494, %v509
        %v531 = vadd.f32 %v495, %v509
        %v532 = vadd.f32 %v496, %v509
        %v533 = vadd.f32 %v497, %v509
        %v534 = vadd.f32 %v498, %v509
        %v535 = vadd.f32 %v499, %v509
        %v536 = vadd.f32 %v500, %v509
        %v537 = vadd.f32 %v501, %v509
        %v538 = vadd.f32 %v502, %v509
        %v539 = vadd.f32 %v503, %v509
        %v540 = vadd.f32 %v504, %v509
        %v541 = vadd.f32 %v505, %v509
        %v542 = vadd.f32 %v506, %v509
        %v543 = vmax.f32 %v511, 0.0
        %v544 = vmax.f32 %v512, 0.0
        %v545 = vmax.f32 %v513, 0.0
        %v546 = vmax.f32 %v514, 0.0
        %v547 = vmax.f32 %v515, 0.0
        %v548 = vmax.f32 %v516, 0.0
        %v549 = vmax.f32 %v517, 0.0
        %v550 = vmax.f32 %v518, 0.0
        %v551 = vmax.f32 %v519, 0.0
        %v552 = vmax.f32 %v520, 0.0
        %v553 = vmax.f32 %v521, 0.0
        %v554 = vmax.f32 %v522, 0.0
        %v555 = vmax.f32 %v523, 0.0
        %v556 = vmax.f32 %v524, 0.0
        %v557 = vmax.f32 %v525, 0.0
        %v558 = vmax.f32 %v526, 0.0
        %v559 = vmax.f32 %v527, 0.0
        %v560 = vmax.f32 %v528, 0.0
        %v561 = vmax.f32 %v529, 0.0
        %v562 = vmax.f32 %v530, 0.0
        %v563 = vmax.f32 %v531, 0.0
        %v564 = vmax.f32 %v532, 0.0
        %v565 = vmax.f32 %v533, 0.0
        %v566 = vmax.f32 %v534, 0.0
        %v567 = vmax.f32 %v535, 0.0
        %v568 = vmax.f32 %v536, 0.0
        %v569 = vmax.f32 %v537, 0.0
        %v570 = vmax.f32 %v538, 0.0
        %v571 = vmax.f32 %v539, 0.0
        %v572 = vmax.f32 %v540, 0.0
        %v573 = vmax.f32 %v541, 0.0
        %v574 = vmax.f32 %v542, 0.0
        %v575 = vld [vmem:[%s6] sm:$0xff]
        %v576 = vld [vmem:[%s6 + $0x8] sm:$0xff]
        %v577 = vld [vmem:[%s6 + $0x10] sm:$0xff]
        %v578 = vld [vmem:[%s6 + $0x18] sm:$0xff]
        %v579 = vld [vmem:[%s6 + $0x20] sm:$0xff]
        %v580 = vld [vmem:[%s6 + $0x28] sm:$0xff]
        %v581 = vld [vmem:[%s6 + $0x30] sm:$0xff]
        %v582 = vld [vmem:[%s6 + $0x38] sm:$0xff]
        %v583 = vld [vmem:[%s6 + $0x40] sm:$0xff]
        %v584 = vld [vmem:[%s6 + $0x48] sm:$0xff]
        %v585 = vld [vmem:[%s6 + $0x50] sm:$0xff]
        %v586 = vld [vmem:[%s6 + $0x58] sm:$0xff]
        %v587 = vld [vmem:[%s6 + $0x60] sm:$0xff]
        %v588 = vld [vmem:[%s6 + $0x68] sm:$0xff]
        %v589 = vld [vmem:[%s6 + $0x70] sm:$0xff]
        %v590 = vld [vmem:[%s6 + $0x78] sm:$0xff]
        %v591 = vld [vmem:[%s7] sm:$0x1]
        %v593 = vperm.slane %v591, 0
        %595 = vmatpush.msra.mxu0 %v590
        %596 = vmatpush.msra.mxu0 %v589
        %597 = vmatpush.msra.mxu0 %v588
        %598 = vmatpush.msra.mxu0 %v587
        %599 = vmatpush.msra.mxu0 %v586
        %600 = vmatpush.msra.mxu0 %v585
        %601 = vmatpush.msra.mxu0 %v584
        %602 = vmatpush.msra.mxu0 %v583
        %603 = vmatpush.msra.mxu0 %v582
        %604 = vmatpush.msra.mxu0 %v581
        %605 = vmatpush.msra.mxu0 %v580
        %606 = vmatpush.msra.mxu0 %v579
        %607 = vmatpush.msra.mxu0 %v578
        %608 = vmatpush.msra.mxu0 %v577
        %609 = vmatpush.msra.mxu0 %v576
        %610 = vmatpush.msra.mxu0 %v575
        %611 = vmatmul.f32.gmra.mxu0 %v543
        %v612 = vpop.f32.mrf.mxu0
        %v613 = vadd.f32 %v593, %v612
        %614 = vmatmul.f32.gmra.mxu0 %v544
        %v615 = vpop.f32.mrf.mxu0
        %v616 = vadd.f32 %v593, %v615
        %617 = vmatmul.f32.gmra.mxu0 %v545
        %v618 = vpop.f32.mrf.mxu0
        %v619 = vadd.f32 %v593, %v618
        %620 = vmatmul.f32.gmra.mxu0 %v546
        %v621 = vpop.f32.mrf.mxu0
        %v622 = vadd.f32 %v593, %v621
        %623 = vmatmul.f32.gmra.mxu0 %v547
        %v624 = vpop.f32.mrf.mxu0
        %v625 = vadd.f32 %v593, %v624
        %626 = vmatmul.f32.gmra.mxu0 %v548
        %v627 = vpop.f32.mrf.mxu0
        %v628 = vadd.f32 %v593, %v627
        %629 = vmatmul.f32.gmra.mxu0 %v549
        %v630 = vpop.f32.mrf.mxu0
        %v631 = vadd.f32 %v593, %v630
        %632 = vmatmul.f32.gmra.mxu0 %v550
        %v633 = vpop.f32.mrf.mxu0
        %v634 = vadd.f32 %v593, %v633
        %635 = vmatmul.f32.gmra.mxu0 %v551
        %v636 = vpop.f32.mrf.mxu0
        %v637 = vadd.f32 %v593, %v636
        %638 = vmatmul.f32.gmra.mxu0 %v552
        %v639 = vpop.f32.mrf.mxu0
        %v640 = vadd.f32 %v593, %v639
        %641 = vmatmul.f32.gmra.mxu0 %v553
        %v642 = vpop.f32.mrf.mxu0
        %v643 = vadd.f32 %v593, %v642
        %644 = vmatmul.f32.gmra.mxu0 %v554
        %v645 = vpop.f32.mrf.mxu0
        %v646 = vadd.f32 %v593, %v645
        %647 = vmatmul.f32.gmra.mxu0 %v555
        %v648 = vpop.f32.mrf.mxu0
        %v649 = vadd.f32 %v593, %v648
        %650 = vmatmul.f32.gmra.mxu0 %v556
        %v651 = vpop.f32.mrf.mxu0
        %v652 = vadd.f32 %v593, %v651
        %653 = vmatmul.f32.gmra.mxu0 %v557
        %v654 = vpop.f32.mrf.mxu0
        %v655 = vadd.f32 %v593, %v654
        %656 = vmatmul.f32.gmra.mxu0 %v558
        %v657 = vpop.f32.mrf.mxu0
        %v658 = vadd.f32 %v593, %v657
        %659 = vmatmul.f32.gmra.mxu0 %v559
        %v660 = vpop.f32.mrf.mxu0
        %v661 = vadd.f32 %v593, %v660
        %662 = vmatmul.f32.gmra.mxu0 %v560
        %v663 = vpop.f32.mrf.mxu0
        %v664 = vadd.f32 %v593, %v663
        %665 = vmatmul.f32.gmra.mxu0 %v561
        %v666 = vpop.f32.mrf.mxu0
        %v667 = vadd.f32 %v593, %v666
        %668 = vmatmul.f32.gmra.mxu0 %v562
        %v669 = vpop.f32.mrf.mxu0
        %v670 = vadd.f32 %v593, %v669
        %671 = vmatmul.f32.gmra.mxu0 %v563
        %v672 = vpop.f32.mrf.mxu0
        %v673 = vadd.f32 %v593, %v672
        %674 = vmatmul.f32.gmra.mxu0 %v564
        %v675 = vpop.f32.mrf.mxu0
        %v676 = vadd.f32 %v593, %v675
        %677 = vmatmul.f32.gmra.mxu0 %v565
        %v678 = vpop.f32.mrf.mxu0
        %v679 = vadd.f32 %v593, %v678
        %680 = vmatmul.f32.gmra.mxu0 %v566
        %v681 = vpop.f32.mrf.mxu0
        %v682 = vadd.f32 %v593, %v681
        %683 = vmatmul.f32.gmra.mxu0 %v567
        %v684 = vpop.f32.mrf.mxu0
        %v685 = vadd.f32 %v593, %v684
        %686 = vmatmul.f32.gmra.mxu0 %v568
        %v687 = vpop.f32.mrf.mxu0
        %v688 = vadd.f32 %v593, %v687
        %689 = vmatmul.f32.gmra.mxu0 %v569
        %v690 = vpop.f32.mrf.mxu0
        %v691 = vadd.f32 %v593, %v690
        %692 = vmatmul.f32.gmra.mxu0 %v570
        %v693 = vpop.f32.mrf.mxu0
        %v694 = vadd.f32 %v593, %v693
        %695 = vmatmul.f32.gmra.mxu0 %v571
        %v696 = vpop.f32.mrf.mxu0
        %v697 = vadd.f32 %v593, %v696
        %698 = vmatmul.f32.gmra.mxu0 %v572
        %v699 = vpop.f32.mrf.mxu0
        %v700 = vadd.f32 %v593, %v699
        %701 = vmatmul.f32.gmra.mxu0 %v573
        %v702 = vpop.f32.mrf.mxu0
        %v703 = vadd.f32 %v593, %v702
        %704 = vmatmul.f32.gmra.mxu0 %v574
        %v705 = vpop.f32.mrf.mxu0
        %v706 = vadd.f32 %v593, %v705
        %707 = vdwg.mxu0
        %s708 = smul.u32 %s36, 128
        %v709 = vlaneseq
        %v710 = vshrl.u32 %v709, 7
        %v711 = vadd.s32 %v710, 8
        %v712 = vadd.s32 %v710, 16
        %v713 = vadd.s32 %v710, 24
        %v714 = vadd.s32 %v710, 32
        %v715 = vadd.s32 %v710, 40
        %v716 = vadd.s32 %v710, 48
        %v717 = vadd.s32 %v710, 56
        %v718 = vadd.s32 %v710, 64
        %v719 = vadd.s32 %v710, 72
        %v720 = vadd.s32 %v710, 80
        %v721 = vadd.s32 %v710, 88
        %v722 = vadd.s32 %v710, 96
        %v723 = vadd.s32 %v710, 104
        %v724 = vadd.s32 %v710, 112
        %v725 = vadd.s32 %v710, 120
        %v726 = vstv %s708
        %v727 = vadd.s32 %v726, %v710
        %v728 = vadd.s32 %v726, %v711
        %v729 = vadd.s32 %v726, %v712
        %v730 = vadd.s32 %v726, %v713
        %v731 = vadd.s32 %v726, %v714
        %v732 = vadd.s32 %v726, %v715
        %v733 = vadd.s32 %v726, %v716
        %v734 = vadd.s32 %v726, %v717
        %v735 = vadd.s32 %v726, %v718
        %v736 = vadd.s32 %v726, %v719
        %v737 = vadd.s32 %v726, %v720
        %v738 = vadd.s32 %v726, %v721
        %v739 = vadd.s32 %v726, %v722
        %v740 = vadd.s32 %v726, %v723
        %v741 = vadd.s32 %v726, %v724
        %v742 = vadd.s32 %v726, %v725
        %v743 = vld [vmem:[%s375] sm:$0x3]
        %v744 = vperm.slane %v743, 0
        %v745 = vperm.slane %v743, 1
        %vm746 = vcmp.eq.s32.totalorder %v727, %v744
        %vm747 = vcmp.eq.s32.totalorder %v727, %v745
        %vm748 = vcmp.eq.s32.totalorder %v728, %v744
        %vm749 = vcmp.eq.s32.totalorder %v728, %v745
        %vm750 = vcmp.eq.s32.totalorder %v729, %v744
        %vm751 = vcmp.eq.s32.totalorder %v729, %v745
        %vm752 = vcmp.eq.s32.totalorder %v730, %v744
        %vm753 = vcmp.eq.s32.totalorder %v730, %v745
        %vm754 = vcmp.eq.s32.totalorder %v731, %v744
        %vm755 = vcmp.eq.s32.totalorder %v731, %v745
        %vm756 = vcmp.eq.s32.totalorder %v732, %v744
        %vm757 = vcmp.eq.s32.totalorder %v732, %v745
        %vm758 = vcmp.eq.s32.totalorder %v733, %v744
        %vm759 = vcmp.eq.s32.totalorder %v733, %v745
        %vm760 = vcmp.eq.s32.totalorder %v734, %v744
        %vm761 = vcmp.eq.s32.totalorder %v734, %v745
        %vm762 = vcmp.eq.s32.totalorder %v735, %v744
        %vm763 = vcmp.eq.s32.totalorder %v735, %v745
        %vm764 = vcmp.eq.s32.totalorder %v736, %v744
        %vm765 = vcmp.eq.s32.totalorder %v736, %v745
        %vm766 = vcmp.eq.s32.totalorder %v737, %v744
        %vm767 = vcmp.eq.s32.totalorder %v737, %v745
        %vm768 = vcmp.eq.s32.totalorder %v738, %v744
        %vm769 = vcmp.eq.s32.totalorder %v738, %v745
        %vm770 = vcmp.eq.s32.totalorder %v739, %v744
        %vm771 = vcmp.eq.s32.totalorder %v739, %v745
        %vm772 = vcmp.eq.s32.totalorder %v740, %v744
        %vm773 = vcmp.eq.s32.totalorder %v740, %v745
        %vm774 = vcmp.eq.s32.totalorder %v741, %v744
        %vm775 = vcmp.eq.s32.totalorder %v741, %v745
        %vm776 = vcmp.eq.s32.totalorder %v742, %v744
        %vm777 = vcmp.eq.s32.totalorder %v742, %v745
        %v778 = vsel %vm746, 1, 0
        %v779 = vsel %vm747, 1, 0
        %v780 = vsel %vm748, 1, 0
        %v781 = vsel %vm749, 1, 0
        %v782 = vsel %vm750, 1, 0
        %v783 = vsel %vm751, 1, 0
        %v784 = vsel %vm752, 1, 0
        %v785 = vsel %vm753, 1, 0
        %v786 = vsel %vm754, 1, 0
        %v787 = vsel %vm755, 1, 0
        %v788 = vsel %vm756, 1, 0
        %v789 = vsel %vm757, 1, 0
        %v790 = vsel %vm758, 1, 0
        %v791 = vsel %vm759, 1, 0
        %v792 = vsel %vm760, 1, 0
        %v793 = vsel %vm761, 1, 0
        %v794 = vsel %vm762, 1, 0
        %v795 = vsel %vm763, 1, 0
        %v796 = vsel %vm764, 1, 0
        %v797 = vsel %vm765, 1, 0
        %v798 = vsel %vm766, 1, 0
        %v799 = vsel %vm767, 1, 0
        %v800 = vsel %vm768, 1, 0
        %v801 = vsel %vm769, 1, 0
        %v802 = vsel %vm770, 1, 0
        %v803 = vsel %vm771, 1, 0
        %v804 = vsel %vm772, 1, 0
        %v805 = vsel %vm773, 1, 0
        %v806 = vsel %vm774, 1, 0
        %v807 = vsel %vm775, 1, 0
        %v808 = vsel %vm776, 1, 0
        %v809 = vsel %vm777, 1, 0
        %v810 = vcvt.s32.f32 %v778
        %v811 = vcvt.s32.f32 %v779
        %v812 = vcvt.s32.f32 %v780
        %v813 = vcvt.s32.f32 %v781
        %v814 = vcvt.s32.f32 %v782
        %v815 = vcvt.s32.f32 %v783
        %v816 = vcvt.s32.f32 %v784
        %v817 = vcvt.s32.f32 %v785
        %v818 = vcvt.s32.f32 %v786
        %v819 = vcvt.s32.f32 %v787
        %v820 = vcvt.s32.f32 %v788
        %v821 = vcvt.s32.f32 %v789
        %v822 = vcvt.s32.f32 %v790
        %v823 = vcvt.s32.f32 %v791
        %v824 = vcvt.s32.f32 %v792
        %v825 = vcvt.s32.f32 %v793
        %v826 = vcvt.s32.f32 %v794
        %v827 = vcvt.s32.f32 %v795
        %v828 = vcvt.s32.f32 %v796
        %v829 = vcvt.s32.f32 %v797
        %v830 = vcvt.s32.f32 %v798
        %v831 = vcvt.s32.f32 %v799
        %v832 = vcvt.s32.f32 %v800
        %v833 = vcvt.s32.f32 %v801
        %v834 = vcvt.s32.f32 %v802
        %v835 = vcvt.s32.f32 %v803
        %v836 = vcvt.s32.f32 %v804
        %v837 = vcvt.s32.f32 %v805
        %v838 = vcvt.s32.f32 %v806
        %v839 = vcvt.s32.f32 %v807
        %v840 = vcvt.s32.f32 %v808
        %v841 = vcvt.s32.f32 %v809
        %v842 = vld [vmem:[%s384] sm:$0xff]
        %v843 = vld [vmem:[%s384 + $0x8] sm:$0xff]
        %v844 = vld [vmem:[%s384 + $0x10] sm:$0xff]
        %v845 = vld [vmem:[%s384 + $0x18] sm:$0xff]
        %v846 = vld [vmem:[%s384 + $0x20] sm:$0xff]
        %v847 = vld [vmem:[%s384 + $0x28] sm:$0xff]
        %v848 = vld [vmem:[%s384 + $0x30] sm:$0xff]
        %v849 = vld [vmem:[%s384 + $0x38] sm:$0xff]
        %v850 = vld [vmem:[%s384 + $0x40] sm:$0xff]
        %v851 = vld [vmem:[%s384 + $0x48] sm:$0xff]
        %v852 = vld [vmem:[%s384 + $0x50] sm:$0xff]
        %v853 = vld [vmem:[%s384 + $0x58] sm:$0xff]
        %v854 = vld [vmem:[%s384 + $0x60] sm:$0xff]
        %v855 = vld [vmem:[%s384 + $0x68] sm:$0xff]
        %v856 = vld [vmem:[%s384 + $0x70] sm:$0xff]
        %v857 = vld [vmem:[%s384 + $0x78] sm:$0xff]
        %858 = vmatpush.msra.mxu0 %v658
        %859 = vmatpush.msra.mxu0 %v655
        %860 = vmatpush.msra.mxu0 %v652
        %861 = vmatpush.msra.mxu0 %v649
        %862 = vmatpush.msra.mxu0 %v646
        %863 = vmatpush.msra.mxu0 %v643
        %864 = vmatpush.msra.mxu0 %v640
        %865 = vmatpush.msra.mxu0 %v637
        %866 = vmatpush.msra.mxu0 %v634
        %867 = vmatpush.msra.mxu0 %v631
        %868 = vmatpush.msra.mxu0 %v628
        %869 = vmatpush.msra.mxu0 %v625
        %870 = vmatpush.msra.mxu0 %v622
        %871 = vmatpush.msra.mxu0 %v619
        %872 = vmatpush.msra.mxu0 %v616
        %873 = vmatpush.msra.mxu0 %v613
        %874 = vmatmul.f32.gmra.mxu0 %v810
        %v875 = vpop.f32.mrf.mxu0
        %v876 = vadd.f32 0.0, %v875
        %877 = vmatmul.f32.gmra.mxu0 %v812
        %v878 = vpop.f32.mrf.mxu0
        %v879 = vadd.f32 0.0, %v878
        %880 = vmatmul.f32.gmra.mxu0 %v814
        %v881 = vpop.f32.mrf.mxu0
        %v882 = vadd.f32 0.0, %v881
        %883 = vmatmul.f32.gmra.mxu0 %v816
        %v884 = vpop.f32.mrf.mxu0
        %v885 = vadd.f32 0.0, %v884
        %886 = vmatmul.f32.gmra.mxu0 %v818
        %v887 = vpop.f32.mrf.mxu0
        %v888 = vadd.f32 0.0, %v887
        %889 = vmatmul.f32.gmra.mxu0 %v820
        %v890 = vpop.f32.mrf.mxu0
        %v891 = vadd.f32 0.0, %v890
        %892 = vmatmul.f32.gmra.mxu0 %v822
        %v893 = vpop.f32.mrf.mxu0
        %v894 = vadd.f32 0.0, %v893
        %895 = vmatmul.f32.gmra.mxu0 %v824
        %v896 = vpop.f32.mrf.mxu0
        %v897 = vadd.f32 0.0, %v896
        %898 = vmatmul.f32.gmra.mxu0 %v826
        %v899 = vpop.f32.mrf.mxu0
        %v900 = vadd.f32 0.0, %v899
        %901 = vmatmul.f32.gmra.mxu0 %v828
        %v902 = vpop.f32.mrf.mxu0
        %v903 = vadd.f32 0.0, %v902
        %904 = vmatmul.f32.gmra.mxu0 %v830
        %v905 = vpop.f32.mrf.mxu0
        %v906 = vadd.f32 0.0, %v905
        %907 = vmatmul.f32.gmra.mxu0 %v832
        %v908 = vpop.f32.mrf.mxu0
        %v909 = vadd.f32 0.0, %v908
        %910 = vmatmul.f32.gmra.mxu0 %v834
        %v911 = vpop.f32.mrf.mxu0
        %v912 = vadd.f32 0.0, %v911
        %913 = vmatmul.f32.gmra.mxu0 %v836
        %v914 = vpop.f32.mrf.mxu0
        %v915 = vadd.f32 0.0, %v914
        %916 = vmatmul.f32.gmra.mxu0 %v838
        %v917 = vpop.f32.mrf.mxu0
        %v918 = vadd.f32 0.0, %v917
        %919 = vmatmul.f32.gmra.mxu0 %v840
        %v920 = vpop.f32.mrf.mxu0
        %v921 = vadd.f32 0.0, %v920
        %922 = vdwg.mxu0
        %923 = vmatpush.msra.mxu0 %v706
        %924 = vmatpush.msra.mxu0 %v703
        %925 = vmatpush.msra.mxu0 %v700
        %926 = vmatpush.msra.mxu0 %v697
        %927 = vmatpush.msra.mxu0 %v694
        %928 = vmatpush.msra.mxu0 %v691
        %929 = vmatpush.msra.mxu0 %v688
        %930 = vmatpush.msra.mxu0 %v685
        %931 = vmatpush.msra.mxu0 %v682
        %932 = vmatpush.msra.mxu0 %v679
        %933 = vmatpush.msra.mxu0 %v676
        %934 = vmatpush.msra.mxu0 %v673
        %935 = vmatpush.msra.mxu0 %v670
        %936 = vmatpush.msra.mxu0 %v667
        %937 = vmatpush.msra.mxu0 %v664
        %938 = vmatpush.msra.mxu0 %v661
        %939 = vmatmul.f32.gmra.mxu0 %v811
        %v940 = vpop.f32.mrf.mxu0
        %v941 = vadd.f32 %v876, %v940
        %942 = vmatmul.f32.gmra.mxu0 %v813
        %v943 = vpop.f32.mrf.mxu0
        %v944 = vadd.f32 %v879, %v943
        %945 = vmatmul.f32.gmra.mxu0 %v815
        %v946 = vpop.f32.mrf.mxu0
        %v947 = vadd.f32 %v882, %v946
        %948 = vmatmul.f32.gmra.mxu0 %v817
        %v949 = vpop.f32.mrf.mxu0
        %v950 = vadd.f32 %v885, %v949
        %951 = vmatmul.f32.gmra.mxu0 %v819
        %v952 = vpop.f32.mrf.mxu0
        %v953 = vadd.f32 %v888, %v952
        %954 = vmatmul.f32.gmra.mxu0 %v821
        %v955 = vpop.f32.mrf.mxu0
        %v956 = vadd.f32 %v891, %v955
        %957 = vmatmul.f32.gmra.mxu0 %v823
        %v958 = vpop.f32.mrf.mxu0
        %v959 = vadd.f32 %v894, %v958
        %960 = vmatmul.f32.gmra.mxu0 %v825
        %v961 = vpop.f32.mrf.mxu0
        %v962 = vadd.f32 %v897, %v961
        %963 = vmatmul.f32.gmra.mxu0 %v827
        %v964 = vpop.f32.mrf.mxu0
        %v965 = vadd.f32 %v900, %v964
        %966 = vmatmul.f32.gmra.mxu0 %v829
        %v967 = vpop.f32.mrf.mxu0
        %v968 = vadd.f32 %v903, %v967
        %969 = vmatmul.f32.gmra.mxu0 %v831
        %v970 = vpop.f32.mrf.mxu0
        %v971 = vadd.f32 %v906, %v970
        %972 = vmatmul.f32.gmra.mxu0 %v833
        %v973 = vpop.f32.mrf.mxu0
        %v974 = vadd.f32 %v909, %v973
        %975 = vmatmul.f32.gmra.mxu0 %v835
        %v976 = vpop.f32.mrf.mxu0
        %v977 = vadd.f32 %v912, %v976
        %978 = vmatmul.f32.gmra.mxu0 %v837
        %v979 = vpop.f32.mrf.mxu0
        %v980 = vadd.f32 %v915, %v979
        %981 = vmatmul.f32.gmra.mxu0 %v839
        %v982 = vpop.f32.mrf.mxu0
        %v983 = vadd.f32 %v918, %v982
        %984 = vmatmul.f32.gmra.mxu0 %v841
        %v985 = vpop.f32.mrf.mxu0
        %v986 = vadd.f32 %v921, %v985
        %987 = vdwg.mxu0
        %v988 = vadd.f32 %v842, %v941
        %v989 = vadd.f32 %v843, %v944
        %v990 = vadd.f32 %v844, %v947
        %v991 = vadd.f32 %v845, %v950
        %v992 = vadd.f32 %v846, %v953
        %v993 = vadd.f32 %v847, %v956
        %v994 = vadd.f32 %v848, %v959
        %v995 = vadd.f32 %v849, %v962
        %v996 = vadd.f32 %v850, %v965
        %v997 = vadd.f32 %v851, %v968
        %v998 = vadd.f32 %v852, %v971
        %v999 = vadd.f32 %v853, %v974
        %v1000 = vadd.f32 %v854, %v977
        %v1001 = vadd.f32 %v855, %v980
        %v1002 = vadd.f32 %v856, %v983
        %v1003 = vadd.f32 %v857, %v986
        %1004 = vst [vmem:[%s384] sm:$0xff] %v988
        %1005 = vst [vmem:[%s384 + $0x8] sm:$0xff] %v989
        %1006 = vst [vmem:[%s384 + $0x10] sm:$0xff] %v990
        %1007 = vst [vmem:[%s384 + $0x18] sm:$0xff] %v991
        %1008 = vst [vmem:[%s384 + $0x20] sm:$0xff] %v992
        %1009 = vst [vmem:[%s384 + $0x28] sm:$0xff] %v993
        %1010 = vst [vmem:[%s384 + $0x30] sm:$0xff] %v994
        %1011 = vst [vmem:[%s384 + $0x38] sm:$0xff] %v995
        %1012 = vst [vmem:[%s384 + $0x40] sm:$0xff] %v996
        %1013 = vst [vmem:[%s384 + $0x48] sm:$0xff] %v997
        %1014 = vst [vmem:[%s384 + $0x50] sm:$0xff] %v998
        %1015 = vst [vmem:[%s384 + $0x58] sm:$0xff] %v999
        %1016 = vst [vmem:[%s384 + $0x60] sm:$0xff] %v1000
        %1017 = vst [vmem:[%s384 + $0x68] sm:$0xff] %v1001
        %1018 = vst [vmem:[%s384 + $0x70] sm:$0xff] %v1002
        %1019 = vst [vmem:[%s384 + $0x78] sm:$0xff] %v1003
      $region52: #{_edge_conv_device.1} parent=43 // pred_fallthru
        _
      %s1020 = smul.u32 16, %s36
      %p1021 = scmp.lt.s32.totalorder %s1020, 31
      %s1022 = scalar_select %p1021, %s1020, 31
      %s1023 = smul.addr %s1022, 8
      %s1024 = scalar_lea.vmem %s8, %s1023
      // Predicated region
      $region53: #{_edge_conv_device.1} parent=43 // pred_check
        %p1025 = pneg %p221
      $region54: #{_edge_conv_device.1} parent=43 // pred_check_branch
        %1027 = sbr.rel (%p1025) target = $region56
      $region55: #{_edge_conv_device.1} parent=43 // pred_region
        %s1028 = smul.u32 16, %s36
      $region56: #{_edge_conv_device.1} parent=43 // pred_fallthru
        _
    $region44: #{_edge_conv_device.1} parent=5 // pred_fallthru
      _
    %p1029 = scmp.le.s32.totalorder 2, %s27
    // Predicated region
    $region57: #{_edge_conv_device.1} parent=5 // pred_check
      %p1030 = pneg %p1029
    $region58: #{_edge_conv_device.1} parent=5 // pred_check_branch
      %1032 = sbr.rel (%p1030) target = $region60
    $region59: #{_edge_conv_device.1} parent=5 // pred_region
      %s1033 = ssub.s32 %s27, 2
      // Predicated region
      $region61: #{_edge_conv_device.1} parent=59 // pred_check
        %p1034 = pneg %p227
      $region62: #{_edge_conv_device.1} parent=59 // pred_check_branch
        %1036 = sbr.rel (%p1034) target = $region64
      $region63: #{_edge_conv_device.1} parent=59 // pred_region
        %s1037 = smul.u32 16, %s38
        %p1038 = scmp.lt.s32.totalorder %s1037, 31
        %s1039 = scalar_select %p1038, %s1037, 31
        %s1040 = smul.addr %s1039, 8
        %s1041 = scalar_lea.vmem %s8, %s1040
      $region64: #{_edge_conv_device.1} parent=59 // pred_fallthru
        _
    $region60: #{_edge_conv_device.1} parent=5 // pred_fallthru
      _
  $region6: #{_edge_conv_device.1} parent=0 // loop_footer
    %s31 = sadd.s32 1, %s27
  $region7: #{_edge_conv_device.1} parent=0 // loop_footer_branch
    %26 = sbr.rel target = $region3
  $region8: #{_edge_conv_device.1} parent=0 // loop_exit
    _

</llo_original>
